<compile_context>
chip_gen: v5e
topology: v5e:2x2
jax: 0.10.0
libtpu: 0.0.40
codegen_flags: <defaults>
</compile_context>

<pallas_src>
import functools

import jax
import jax.numpy as jnp
from jax.experimental import pallas as pl
from jax.experimental.pallas import tpu as pltpu


def positional_encoding_kernel(ids_ref, word_ref, pos_ref, out_ref, *,
                               seq_len, vocab_size):
    # ids_ref:  (1, S, 1) int32  -- token ids for this batch element (sublane-oriented)
    # word_ref: (V, E)   float32 -- word-embedding table, resident in VMEM
    # pos_ref:  (block_size, E) float32 -- position-embedding table, resident in VMEM
    # out_ref:  (1, S, E) float32
    ids = ids_ref[0]  # (S, 1) int32

    # Build the one-hot selector with a 2-D iota (lane axis = vocab, 128-lane dense)
    # and turn the embedding gather into a single MXU matmul.
    col = jax.lax.broadcasted_iota(jnp.int32, (seq_len, vocab_size), 1)
    one_hot = (col == ids).astype(jnp.float32)                       # (S, V)
    word = jnp.dot(one_hot, word_ref[...],
                   preferred_element_type=jnp.float32)               # (S, E)

    # positions = arange(S): the position-embedding lookup is a static slice.
    pos = pos_ref[0:seq_len, :]                                      # (S, E)

    out_ref[0] = word + pos


def positional_encoding(ids, word_table, pos_table):
    """ids: (B, S) int32; word_table: (V, E); pos_table: (block_size, E)."""
    B, S = ids.shape
    V, E = word_table.shape
    block_size = pos_table.shape[0]
    assert S <= block_size, "sequence length must not exceed block_size"

    # Wrapper-side layout plumbing: present token ids as (B, S, 1) so the kernel
    # sees them sublane-oriented (no in-kernel transpose needed).
    ids3 = ids.astype(jnp.int32).reshape(B, S, 1)

    kernel = functools.partial(
        positional_encoding_kernel, seq_len=S, vocab_size=V
    )

    return pl.pallas_call(
        kernel,
        out_shape=jax.ShapeDtypeStruct((B, S, E), jnp.float32),
        grid=(B,),
        in_specs=[
            pl.BlockSpec((1, S, 1), lambda b: (b, 0, 0)),        # token ids
            pl.BlockSpec((V, E), lambda b: (0, 0)),              # word-embedding table
            pl.BlockSpec((block_size, E), lambda b: (0, 0)),     # position-embedding table
        ],
        out_specs=pl.BlockSpec((1, S, E), lambda b: (b, 0, 0)),
        compiler_params=pltpu.CompilerParams(
            dimension_semantics=("parallel",),   # batch axis -> megacore sharding on v7x
        ),
    )(ids3, word_table, pos_table)


if __name__ == "__main__":
    # Small shapes consistent with the module: block_size=32 (from the spec),
    # batch=2, seq=8, vocab=128, embedding_dim=32.
    B, S = 2, 8
    vocab_size, embedding_dim, block_size = 128, 32, 32

    key = jax.random.PRNGKey(0)
    k_ids, k_w, k_p = jax.random.split(key, 3)
    ids = jax.random.randint(k_ids, (B, S), 0, vocab_size, dtype=jnp.int32)
    word_table = jax.random.normal(k_w, (vocab_size, embedding_dim), jnp.float32)
    pos_table = jax.random.normal(k_p, (block_size, embedding_dim), jnp.float32)

    out = positional_encoding(ids, word_table, pos_table)
    jax.block_until_ready(out)

    # Pure-JAX reference: word_embedding(x) + position_embedding(arange(S))
    ref = word_table[ids] + pos_table[:S][None]
    assert out.shape == (B, S, embedding_dim)
    assert jnp.allclose(out, ref, atol=1e-4, rtol=1e-4), "mismatch vs reference"

    print("KERNEL_OK")
</pallas_src>

<mosaic_0001>
module attributes {stable_mosaic.version = 11 : i64} {
  func.func @positional_encoding_kernel(%arg0: i32, %arg1: memref<1x8x1xi32, #tpu.memory_space<vmem>>, %arg2: memref<128x32xf32, #tpu.memory_space<vmem>>, %arg3: memref<32x32xf32, #tpu.memory_space<vmem>>, %arg4: memref<1x8x32xf32, #tpu.memory_space<vmem>>) attributes {dimension_semantics = [#tpu.dimension_semantics<parallel>], iteration_bounds = array<i64: 2>, scalar_prefetch = 0 : i64, scratch_operands = 0 : i64, tpu.core_type = #tpu.core_type<tc>, window_params = [{transform_indices = @transform_0, window_bounds = array<i64: 1, 8, 1>}, {pipeline_mode = #tpu.pipeline_mode<synchronous>, transform_indices = @transform_1, window_bounds = array<i64: 128, 32>}, {pipeline_mode = #tpu.pipeline_mode<synchronous>, transform_indices = @transform_2, window_bounds = array<i64: 32, 32>}, {transform_indices = @transform_3, window_bounds = array<i64: 1, 8, 32>}]} {
    %c0 = arith.constant 0 : index
    %c0_0 = arith.constant 0 : index
    %c0_1 = arith.constant 0 : index
    %0 = vector.load %arg1[%c0, %c0_0, %c0_1] : memref<1x8x1xi32, #tpu.memory_space<vmem>>, vector<1x8x1xi32>
    %1 = vector.shape_cast %0 : vector<1x8x1xi32> to vector<8x1xi32>
    %2 = tpu.iota {dimensions = array<i32: 1>} : vector<8x128xi32>
    %3 = vector.broadcast %1 : vector<8x1xi32> to vector<8x128xi32>
    %4 = arith.cmpi eq, %2, %3 : vector<8x128xi32>
    %5 = arith.extui %4 : vector<8x128xi1> to vector<8x128xi32>
    %6 = arith.sitofp %5 : vector<8x128xi32> to vector<8x128xf32>
    %c0_2 = arith.constant 0 : index
    %c0_3 = arith.constant 0 : index
    %7 = vector.load %arg2[%c0_2, %c0_3] : memref<128x32xf32, #tpu.memory_space<vmem>>, vector<128x32xf32>
    %cst = arith.constant dense<0.000000e+00> : vector<8x32xf32>
    %8 = tpu.matmul %6, %7, %cst {dimension_numbers = #tpu.dot_dimension_numbers<[1], [0], [0], [1], [0, 0, 1, 1], [], []>} : vector<8x128xf32>, vector<128x32xf32>, vector<8x32xf32> -> vector<8x32xf32>
    %c0_4 = arith.constant 0 : index
    %c0_5 = arith.constant 0 : index
    %9 = vector.load %arg3[%c0_4, %c0_5] : memref<32x32xf32, #tpu.memory_space<vmem>>, vector<8x32xf32>
    %10 = arith.addf %8, %9 : vector<8x32xf32>
    %c0_6 = arith.constant 0 : index
    %c0_7 = arith.constant 0 : index
    %c0_8 = arith.constant 0 : index
    %11 = vector.load %arg4[%c0_6, %c0_7, %c0_8] : memref<1x8x32xf32, #tpu.memory_space<vmem>>, vector<1x8x32xf32>
    %12 = vector.shape_cast %11 : vector<1x8x32xf32> to vector<8x32xf32>
    %13 = vector.shape_cast %10 : vector<8x32xf32> to vector<1x8x32xf32>
    tpu.vector_store %arg4[%c0_6, %c0_7, %c0_8], %13 {strides = array<i32>} : memref<1x8x32xf32, #tpu.memory_space<vmem>>, vector<1x8x32xf32>,
    return
  }
  func.func @transform_0(%arg0: i32) -> (i32, i32, i32) {
    %c0_i32 = arith.constant 0 : i32
    %c0_i32_0 = arith.constant 0 : i32
    %c0_i32_1 = arith.constant 0 : i32
    return %arg0, %c0_i32, %c0_i32_0 : i32, i32, i32
  }
  func.func @transform_1(%arg0: i32) -> (i32, i32) {
    %c0_i32 = arith.constant 0 : i32
    %c0_i32_0 = arith.constant 0 : i32
    %c0_i32_1 = arith.constant 0 : i32
    return %c0_i32, %c0_i32_0 : i32, i32
  }
  func.func @transform_2(%arg0: i32) -> (i32, i32) {
    %c0_i32 = arith.constant 0 : i32
    %c0_i32_0 = arith.constant 0 : i32
    %c0_i32_1 = arith.constant 0 : i32
    return %c0_i32, %c0_i32_0 : i32, i32
  }
  func.func @transform_3(%arg0: i32) -> (i32, i32, i32) {
    %c0_i32 = arith.constant 0 : i32
    %c0_i32_0 = arith.constant 0 : i32
    %c0_i32_1 = arith.constant 0 : i32
    return %arg0, %c0_i32, %c0_i32_0 : i32, i32, i32
  }
}

</mosaic_0001>

<llo_original>
// kernel: tpu_custom_call.1
$region0: #{tpu_custom_call.1}
  #allocation0 [shape = 'u32[]', space=smem, size = 0x4, offset = 0x4, fixed_abs, tag = 'smem constant byte address 0x4 - core index']
  #allocation1 [shape = 'u32[72,128]{1,0:T(1,128)}', space=vmem, size = 0x9000, scoped, tag = 'internal scratch']
  %s0 = inlined_call_operand.vmem [shape: s32[2,8,1], index: 0, kind: input, shape index: {}]
  %s1 = inlined_call_operand.vmem [shape: f32[128,32], index: 1, kind: input, shape index: {}]
  %s2 = inlined_call_operand.vmem [shape: f32[32,32], index: 2, kind: input, shape index: {}]
  %s3 = inlined_call_operand.hbm [shape: f32[2,8,32], index: 3, kind: output, shape index: {}]
  %s4 = sld [smem:[#allocation0]]
  $region45: #{tpu_custom_call.1} parent=0
    _
  %s6 = ssub.s32 1, %s4
  %s7 = scalar_select 0, %s6, %s4
  $region1: #{tpu_custom_call.1} parent=0
    #allocation2 [shape = 'u8[8192]{0}', space=vmem, size = 0x2000, scoped, tag = 'output window, operand 0']
    #allocation3 [shape = 's32[2]{0}', space=sflag, size = 0x8, scoped, tag = 'scoped memory for tpu_custom_call.1']
    %8 = vsyncpa [#allocation3], 0
    %s9 = scalar_lea.sflag [#allocation3], 1
    %10 = vsyncpa %s9, 0
    loop: start=0, step=1, limit=4
    $region2: #{tpu_custom_call.1} parent=1 // loop_pre_header
      _
    $region3: #{tpu_custom_call.1} parent=1 // loop_header
      %s12 = sphi 0, %s16
      %p13 = scmp.ge.s32.totalorder %s12, 4
      %s22 = sphi 0, %s24
      %s25 = sphi 0, %s22
      %s26 = sphi 0, %s25
      %s42 = sphi 0, %s26
      %s46 = sphi 0, %s46
      %s48 = sphi 0, %s46
      %s49 = sphi 0, %s48
      %s63 = sphi 0, %s49
      %s67 = sphi 0, %s67
      %s69 = sphi 0, %s67
      %s70 = sphi 0, %s69
      %s84 = sphi 0, %s70
      %s90 = sphi 0, %s92
      %s93 = sphi 0, %s90
      %s94 = sphi 0, %s93
      %s110 = sphi 0, %s94
    $region4: #{tpu_custom_call.1} parent=1 // loop_header_branch
      %15 = sbr.rel (%p13) target = $region8
    $region5: #{tpu_custom_call.1} parent=1 // loop_body
      %s17 = ssub.s32 %s12, 1
      %s18 = ssub.s32 %s12, 2
      %s19 = sadd.s32 %s12, 1
      %s20 = ssub.s32 %s12, %s19
      %p21 = scmp.eq.s32.totalorder %s20, 0
      %s23 = sadd.s32 %s22, 1
      %s24 = scalar_select %p21, %s22, %s23
      %p27 = pneg %p21
      %p28 = scmp.eq.s32.totalorder %s12, 1
      %p29 = por %p27, %p28
      %p30 = scmp.ne.s32.totalorder %s22, %s25
      %p31 = scmp.eq.s32.totalorder %s12, 0
      %p32 = por %p30, %p31
      %p33 = scmp.ne.s32.totalorder %s22, %s25
      %p34 = scmp.eq.s32.totalorder %s17, 1
      %p35 = por %p33, %p34
      %p36 = scmp.ne.s32.totalorder %s25, %s26
      %p37 = scmp.eq.s32.totalorder %s17, 0
      %p38 = por %p36, %p37
      %p39 = scmp.ne.s32.totalorder %s25, %s26
      %p40 = scmp.eq.s32.totalorder %s18, 1
      %p41 = por %p39, %p40
      %p43 = scmp.ne.s32.totalorder %s26, %s42
      %p44 = scmp.eq.s32.totalorder %s18, 0
      %p45 = por %p43, %p44
      %s47 = sadd.s32 %s46, 1
      %p50 = scmp.eq.s32.totalorder %s12, 1
      %p51 = scmp.ne.s32.totalorder %s46, %s48
      %p52 = scmp.eq.s32.totalorder %s12, 0
      %p53 = por %p51, %p52
      %p54 = scmp.ne.s32.totalorder %s46, %s48
      %p55 = scmp.eq.s32.totalorder %s17, 1
      %p56 = por %p54, %p55
      %p57 = scmp.ne.s32.totalorder %s48, %s49
      %p58 = scmp.eq.s32.totalorder %s17, 0
      %p59 = por %p57, %p58
      %p60 = scmp.ne.s32.totalorder %s48, %s49
      %p61 = scmp.eq.s32.totalorder %s18, 1
      %p62 = por %p60, %p61
      %p64 = scmp.ne.s32.totalorder %s49, %s63
      %p65 = scmp.eq.s32.totalorder %s18, 0
      %p66 = por %p64, %p65
      %s68 = sadd.s32 %s67, 1
      %p71 = scmp.eq.s32.totalorder %s12, 1
      %p72 = scmp.ne.s32.totalorder %s67, %s69
      %p73 = scmp.eq.s32.totalorder %s12, 0
      %p74 = por %p72, %p73
      %p75 = scmp.ne.s32.totalorder %s67, %s69
      %p76 = scmp.eq.s32.totalorder %s17, 1
      %p77 = por %p75, %p76
      %p78 = scmp.ne.s32.totalorder %s69, %s70
      %p79 = scmp.eq.s32.totalorder %s17, 0
      %p80 = por %p78, %p79
      %p81 = scmp.ne.s32.totalorder %s69, %s70
      %p82 = scmp.eq.s32.totalorder %s18, 1
      %p83 = por %p81, %p82
      %p85 = scmp.ne.s32.totalorder %s70, %s84
      %p86 = scmp.eq.s32.totalorder %s18, 0
      %p87 = por %p85, %p86
      %s88 = ssub.s32 %s12, %s19
      %p89 = scmp.eq.s32.totalorder %s88, 0
      %s91 = sadd.s32 %s90, 1
      %s92 = scalar_select %p89, %s90, %s91
      %p95 = pneg %p89
      %p96 = scmp.eq.s32.totalorder %s12, 1
      %p97 = por %p95, %p96
      %p98 = scmp.ne.s32.totalorder %s90, %s93
      %p99 = scmp.eq.s32.totalorder %s12, 0
      %p100 = por %p98, %p99
      %p101 = scmp.ne.s32.totalorder %s90, %s93
      %p102 = scmp.eq.s32.totalorder %s17, 1
      %p103 = por %p101, %p102
      %p104 = scmp.ne.s32.totalorder %s93, %s94
      %p105 = scmp.eq.s32.totalorder %s17, 0
      %p106 = por %p104, %p105
      %p107 = scmp.ne.s32.totalorder %s93, %s94
      %p108 = scmp.eq.s32.totalorder %s18, 1
      %p109 = por %p107, %p108
      %p111 = scmp.ne.s32.totalorder %s94, %s110
      %p112 = scmp.eq.s32.totalorder %s18, 0
      %p113 = por %p111, %p112
      %p114 = scmp.le.s32.totalorder 1, %s12
      %p115 = scmp.lt.s32.totalorder %s12, 3
      %p116 = pnand %p114, %p115
      %p117 = pneg %p116
      // Predicated region
      $region9: #{tpu_custom_call.1} parent=5 // pred_check
        _
      $region10: #{tpu_custom_call.1} parent=5 // pred_check_branch
        %119 = sbr.rel (%p116) target = $region12
      $region11: #{tpu_custom_call.1} parent=5 // pred_region
        %s120 = ssub.s32 %s12, 1
        // Predicated region
        $region13: #{tpu_custom_call.1} parent=11 // pred_check
          %p121 = pneg %p59
        $region14: #{tpu_custom_call.1} parent=11 // pred_check_branch
          %123 = sbr.rel (%p121) target = $region16
        $region15: #{tpu_custom_call.1} parent=11 // pred_region
          _
        $region16: #{tpu_custom_call.1} parent=11 // pred_fallthru
          _
        // Predicated region
        $region17: #{tpu_custom_call.1} parent=11 // pred_check
          %p124 = pneg %p80
        $region18: #{tpu_custom_call.1} parent=11 // pred_check_branch
          %126 = sbr.rel (%p124) target = $region20
        $region19: #{tpu_custom_call.1} parent=11 // pred_region
          _
        $region20: #{tpu_custom_call.1} parent=11 // pred_fallthru
          _
      $region12: #{tpu_custom_call.1} parent=5 // pred_fallthru
        _
      %p127 = scmp.lt.s32.totalorder %s12, 2
      // Predicated region
      $region21: #{tpu_custom_call.1} parent=5 // pred_check
        %p128 = pneg %p127
      $region22: #{tpu_custom_call.1} parent=5 // pred_check_branch
        %130 = sbr.rel (%p128) target = $region24
      $region23: #{tpu_custom_call.1} parent=5 // pred_region
        // Predicated region
        $region25: #{tpu_custom_call.1} parent=23 // pred_check
          %p131 = pneg %p32
        $region26: #{tpu_custom_call.1} parent=23 // pred_check_branch
          %133 = sbr.rel (%p131) target = $region28
        $region27: #{tpu_custom_call.1} parent=23 // pred_region
          %p134 = scmp.lt.s32.totalorder %s12, 1
          %s135 = scalar_select %p134, %s12, 1
          %s136 = smul.addr %s135, 8
          %s137 = scalar_lea.vmem %s0, %s136
        $region28: #{tpu_custom_call.1} parent=23 // pred_fallthru
          _
      $region24: #{tpu_custom_call.1} parent=5 // pred_fallthru
        _
      %p138 = scmp.le.s32.totalorder 1, %s12
      %p139 = scmp.lt.s32.totalorder %s12, 3
      %p140 = pnand %p138, %p139
      %p141 = pneg %p140
      // Predicated region
      $region29: #{tpu_custom_call.1} parent=5 // pred_check
        _
      $region30: #{tpu_custom_call.1} parent=5 // pred_check_branch
        %143 = sbr.rel (%p140) target = $region32
      $region31: #{tpu_custom_call.1} parent=5 // pred_region
        %s144 = ssub.s32 %s12, 1
        %p145 = scmp.lt.s32.totalorder %s17, 1
        %s146 = scalar_select %p145, %s17, 1
        %s147 = smul.addr %s146, 8
        %s148 = scalar_lea.vmem %s0, %s147
        %p149 = pneg %p38
        %p150 = pneg %p35
        %p151 = pneg %p59
        %p152 = pneg %p56
        %p153 = pneg %p80
        %p154 = pneg %p77
        %p155 = pneg %p106
        %p156 = pneg %p103
        %s157 = sand.u32 %s93, 1
        %s158 = scalar_lea.sflag [#allocation3], %s157
        %s159 = sand.u32 %s93, 1
        %s160 = smul.addr %s159, 8
        %s161 = scalar_lea.vmem [#allocation2], %s160
        %p162 = scmp.lt.s32.totalorder %s17, 1
        %s163 = scalar_select %p162, %s17, 1
        %s164 = smul.addr %s163, 8
        %s165 = scalar_lea.vmem %s0, %s164
        %v166 = vld [vmem:[%s165] sm:$0xff]
        %v167 = vlaneseq
        %v168 = vand.u32 %v167, 127
        %169 = vset.pattern.permute.xlu0 0
        %170 = vperm.xlu0 %169, %v166
        %v171 = vpop.permute.xlu0 %170
        %vm172 = vcmp.eq.s32.totalorder %v168, %v171
        %v173 = vsel %vm172, 1, 0
        %v174 = vcvt.s32.f32 %v173
        %v175 = vld [vmem:[%s1] sm:$0xff]
        %v176 = vld [vmem:[%s1 + $0x8] sm:$0xff]
        %v177 = vld [vmem:[%s1 + $0x10] sm:$0xff]
        %v178 = vld [vmem:[%s1 + $0x18] sm:$0xff]
        %v179 = vld [vmem:[%s1 + $0x20] sm:$0xff]
        %v180 = vld [vmem:[%s1 + $0x28] sm:$0xff]
        %v181 = vld [vmem:[%s1 + $0x30] sm:$0xff]
        %v182 = vld [vmem:[%s1 + $0x38] sm:$0xff]
        %v183 = vld [vmem:[%s1 + $0x40] sm:$0xff]
        %v184 = vld [vmem:[%s1 + $0x48] sm:$0xff]
        %v185 = vld [vmem:[%s1 + $0x50] sm:$0xff]
        %v186 = vld [vmem:[%s1 + $0x58] sm:$0xff]
        %v187 = vld [vmem:[%s1 + $0x60] sm:$0xff]
        %v188 = vld [vmem:[%s1 + $0x68] sm:$0xff]
        %v189 = vld [vmem:[%s1 + $0x70] sm:$0xff]
        %v190 = vld [vmem:[%s1 + $0x78] sm:$0xff]
        %v191 = vld [vmem:[%s2] sm:$0xff]
        %192 = vmatpush.msra.mxu0 %v190
        %193 = vmatpush.msra.mxu0 %v189
        %194 = vmatpush.msra.mxu0 %v188
        %195 = vmatpush.msra.mxu0 %v187
        %196 = vmatpush.msra.mxu0 %v186
        %197 = vmatpush.msra.mxu0 %v185
        %198 = vmatpush.msra.mxu0 %v184
        %199 = vmatpush.msra.mxu0 %v183
        %200 = vmatpush.msra.mxu0 %v182
        %201 = vmatpush.msra.mxu0 %v181
        %202 = vmatpush.msra.mxu0 %v180
        %203 = vmatpush.msra.mxu0 %v179
        %204 = vmatpush.msra.mxu0 %v178
        %205 = vmatpush.msra.mxu0 %v177
        %206 = vmatpush.msra.mxu0 %v176
        %207 = vmatpush.msra.mxu0 %v175
        %208 = vmatmul.f32.gmra.mxu0 %v174
        %v209 = vpop.f32.mrf.mxu0
        %v210 = vadd.f32 %v191, %v209
        %211 = vdwg.mxu0
        %vm212 = vcmask 261120
        %213 = vst.msk [vmem:[%s161] sm:$0xff] %vm212, %v210
        %s214 = sand.u32 %s93, 1
        %s215 = scalar_lea.sflag [#allocation3], %s214
        %s216 = sand.u32 %s93, 1
        %s217 = smul.addr %s216, 8
        %s218 = scalar_lea.vmem [#allocation2], %s217
        // Predicated region
        $region33: #{tpu_custom_call.1} parent=31 // pred_check
          %p219 = pneg %p103
        $region34: #{tpu_custom_call.1} parent=31 // pred_check_branch
          %221 = sbr.rel (%p219) target = $region36
        $region35: #{tpu_custom_call.1} parent=31 // pred_region
          %223 = vsyncadd %s215, 0
          %s224 = smul.addr %s17, 8
          %s225 = scalar_lea.hbm %s3, %s224
          %s227 = sshll.u32 %s218, 4
          %s228 = int_to_ptr.vmem [resolvable:$true] %s227
          %s229 = sshll.u32 %s225, 4
          %s230 = int_to_ptr.hbm [resolvable:$true] %s229
          %232 = dma.vmem_to_hbm [thread:$0]  %s228, 128, %s230, %s215
        $region36: #{tpu_custom_call.1} parent=31 // pred_fallthru
          _
      $region32: #{tpu_custom_call.1} parent=5 // pred_fallthru
        _
      %p233 = scmp.le.s32.totalorder 2, %s12
      // Predicated region
      $region37: #{tpu_custom_call.1} parent=5 // pred_check
        %p234 = pneg %p233
      $region38: #{tpu_custom_call.1} parent=5 // pred_check_branch
        %236 = sbr.rel (%p234) target = $region40
      $region39: #{tpu_custom_call.1} parent=5 // pred_region
        %s237 = ssub.s32 %s12, 2
        // Predicated region
        $region41: #{tpu_custom_call.1} parent=39 // pred_check
          %p238 = pneg %p109
        $region42: #{tpu_custom_call.1} parent=39 // pred_check_branch
          %240 = sbr.rel (%p238) target = $region44
        $region43: #{tpu_custom_call.1} parent=39 // pred_region
          %s241 = sand.u32 %s94, 1
          %s242 = scalar_lea.sflag [#allocation3], %s241
          %s243 = sand.u32 %s94, 1
          %s244 = smul.addr %s243, 8
          %s245 = scalar_lea.vmem [#allocation2], %s244
          %247 = dma.done %s242, 128
        $region44: #{tpu_custom_call.1} parent=39 // pred_fallthru
          _
      $region40: #{tpu_custom_call.1} parent=5 // pred_fallthru
        _
    $region6: #{tpu_custom_call.1} parent=1 // loop_footer
      %s16 = sadd.s32 1, %s12
    $region7: #{tpu_custom_call.1} parent=1 // loop_footer_branch
      %11 = sbr.rel target = $region3
    $region8: #{tpu_custom_call.1} parent=1 // loop_exit
      _
    %248 = vsyncpa [#allocation3], 1
    %s249 = scalar_lea.sflag [#allocation3], 1
    %250 = vsyncpa %s249, 1

</llo_original>
